<compile_context>
chip_gen: v7x
topology: tpu7x:2x2x1
jax: 0.10.0
libtpu: 0.0.40
codegen_flags: <defaults>
</compile_context>

<pallas_src>
import math

import jax
import jax.numpy as jnp
from jax.experimental import pallas as pl
from jax.experimental.pallas import tpu as pltpu


def _sigmoid(x):
    # Written out with exp so it lowers through the EUP unconditionally.
    return 1.0 / (1.0 + jnp.exp(-x))


# ---------------------------------------------------------------------------
# Pallas kernel: fused gather + LSTM recurrence + VAE head.
# ---------------------------------------------------------------------------
def _make_encoder_kernel(S, Bp, H, O, Vp):
    SB = S * Bp
    # Full unroll for tiny S; lightly-unrolled fori_loop for long sequences.
    unroll = S if S <= 32 else 8

    def kernel(
        ids_ref,     # (S*Bp, 1)  int32  time-major flattened token ids
        embp_ref,    # (Vp, 4H)   bf16   emb @ W_ih^T (128-lane-padded rows)
        bg_ref,      # (1, 4H)    f32    b_ih + b_hh (kept full precision)
        whh_ref,     # (H, 4H)    bf16   hidden->hidden weights (pre-transposed)
        whead_ref,   # (H, 2O)    bf16   [W_mu^T | W_log_sigma^T]
        bhead_ref,   # (1, 2O)    f32    [b_mu | b_log_sigma]
        eps_ref,     # (Bp, O)    f32    standard-normal noise
        h0_ref,      # (Bp, H)    f32
        c0_ref,      # (Bp, H)    f32
        z_ref,       # (Bp, O)    f32    output: sampled latent
        c_out_ref,   # (Bp, H)    f32    output: final cell state
        xw_ref,      # (S*Bp, 4H) f32    scratch: per-step input projections
    ):
        # --- fused embedding lookup + input projection (off serial chain) ---
        # one_hot(ids) @ (emb @ W_ih^T) == (emb @ W_ih^T)[ids]  (exact gather
        # on the otherwise-idle MXU).  Vp is a multiple of 128 so every
        # compare / cast / load and the contraction feed are unmasked.
        ids = ids_ref[...]                                           # (SB, 1)
        lanes = jax.lax.broadcasted_iota(jnp.int32, (SB, Vp), 1)
        onehot = (lanes == ids).astype(jnp.bfloat16)                 # (SB, Vp)
        xw = jnp.dot(onehot, embp_ref[...],
                     preferred_element_type=jnp.float32)             # (SB, 4H)
        # Bias added once, in f32, off the recurrence.
        xw_ref[...] = xw + bg_ref[...]

        w_hh = whh_ref[...]                                          # (H, 4H) bf16

        # --- LSTM recurrence; h/c carried as values (vregs) ------------------
        def step(t, carry):
            h, c = carry
            row0 = pl.multiple_of(t * Bp, Bp)
            gates = xw_ref[pl.ds(row0, Bp), :] + jnp.dot(
                h.astype(jnp.bfloat16), w_hh,
                preferred_element_type=jnp.float32)                  # (Bp, 4H) f32
            if H >= 128:
                # Gate row spans multiple vregs: slice first so the single-slot
                # EUP only does 3H sigmoid + H tanh per step.
                i_g = _sigmoid(gates[:, 0 * H:1 * H])
                f_g = _sigmoid(gates[:, 1 * H:2 * H])
                g_g = jnp.tanh(gates[:, 2 * H:3 * H])
                o_g = _sigmoid(gates[:, 3 * H:4 * H])
            else:
                # Gate row fits one vreg: full-width transcendental passes,
                # then lane-slice (slicing first would just add masked ops).
                sg = _sigmoid(gates)
                tg = jnp.tanh(gates)
                i_g = sg[:, 0 * H:1 * H]
                f_g = sg[:, 1 * H:2 * H]
                g_g = tg[:, 2 * H:3 * H]
                o_g = sg[:, 3 * H:4 * H]
            c_new = f_g * c + i_g * g_g
            h_new = o_g * jnp.tanh(c_new)
            return h_new, c_new

        h, c = jax.lax.fori_loop(0, S, step, (h0_ref[...], c0_ref[...]),
                                 unroll=unroll)

        # --- fused VAE head: [mu | log_sigma] in a single matmul -------------
        head = jnp.dot(h.astype(jnp.bfloat16), whead_ref[...],
                       preferred_element_type=jnp.float32) + bhead_ref[...]
        mu = head[:, :O]
        sigma = jnp.exp(head[:, O:2 * O])
        z_ref[...] = mu + sigma * eps_ref[...]
        c_out_ref[...] = c

    return kernel


# ---------------------------------------------------------------------------
# Wrapper
# ---------------------------------------------------------------------------
def encoder_forward(src_seq, hidden, params, eps):
    """Reproduces Encoder.forward (eval-mode dropout).

    src_seq: (batch, seq) int32 token ids
    hidden:  (h0, c0), each (n_layers=1, batch, H)
    returns: (z, c) with z: (1, batch, O), c: (1, batch, H)
    """
    B, S = src_seq.shape
    H = params["w_hh_t"].shape[0]
    O = params["w_head_t"].shape[1] // 2
    Vp = params["emb_proj"].shape[0]

    Bp = max(8, ((B + 7) // 8) * 8)          # pad batch to a full sublane group
    SB = S * Bp

    # Time-major, batch-padded, flattened token ids (pad rows use PAD = 0).
    ids_p = jnp.pad(src_seq.astype(jnp.int32), ((0, Bp - B), (0, 0)))
    ids_flat = jnp.transpose(ids_p).reshape(SB, 1)

    pad_rows = lambda a: jnp.pad(a, ((0, Bp - B), (0, 0)))
    h0 = pad_rows(hidden[0][0])
    c0 = pad_rows(hidden[1][0])
    eps_p = pad_rows(eps)

    vmem = pl.BlockSpec(memory_space=pltpu.MemorySpace.VMEM)

    # Rough VMEM budget (table + one-hot temporaries + xw scratch) so the
    # whole-table-in-VMEM design does not trip the default scoped limit
    # (16 MiB on v5e) at moderate V / H.  Capped at v7x's 64 MiB physical.
    vmem_est = (Vp * 4 * H * 2          # emb_proj (bf16)
                + SB * Vp * 6           # iota int32 + one-hot bf16 temporaries
                + SB * 4 * H * 8        # xw value + scratch (f32)
                + (2 << 20))            # headroom
    vmem_limit = int(min(max(vmem_est, 16 << 20), 64 << 20))

    z, c = pl.pallas_call(
        _make_encoder_kernel(S, Bp, H, O, Vp),
        out_shape=(
            jax.ShapeDtypeStruct((Bp, O), jnp.float32),
            jax.ShapeDtypeStruct((Bp, H), jnp.float32),
        ),
        in_specs=[vmem] * 9,
        out_specs=(vmem, vmem),
        scratch_shapes=[pltpu.VMEM((SB, 4 * H), jnp.float32)],
        compiler_params=pltpu.CompilerParams(vmem_limit_bytes=vmem_limit),
    )(
        ids_flat,
        params["emb_proj"],
        params["b_gates"],
        params["w_hh_t"],
        params["w_head_t"],
        params["b_head"],
        eps_p,
        h0,
        c0,
    )

    # Restore PyTorch's (n_layers, batch, ...) hidden convention.
    return z[None, :B, :], c[None, :B, :]


def init_params(key, n_src_vocab, d_word_vec, d_inner_hid, d_out_hid):
    """Synthetic parameters matching the PyTorch module, pre-folded for the kernel."""
    ks = jax.random.split(key, 9)
    initrange = 0.1
    u = lambda k, shape, r: jax.random.uniform(k, shape, jnp.float32, -r, r)

    V, D, H, O = n_src_vocab, d_word_vec, d_inner_hid, d_out_hid

    emb = u(ks[0], (V, D), initrange).at[0].set(0.0)     # padding_idx = 0

    r = float(1.0 / math.sqrt(H))
    w_ih = u(ks[1], (4 * H, D), r)                       # PyTorch layout (4H, D)
    w_hh = u(ks[2], (4 * H, H), r)
    b_ih = u(ks[3], (4 * H,), r)
    b_hh = u(ks[4], (4 * H,), r)

    w_mu = u(ks[5], (O, H), initrange)
    b_mu = u(ks[6], (O,), r)
    w_ls = u(ks[7], (O, H), initrange)
    b_ls = u(ks[8], (O,), r)

    # One-time folding of the input projection into the table:
    #   emb_proj[v] = emb[v] @ W_ih^T   (biases kept separate, in f32).
    emb_proj = emb @ w_ih.T                                  # (V, 4H) f32
    Vp = max(128, ((V + 127) // 128) * 128)                  # lane-aligned vocab pad
    emb_proj = jnp.pad(emb_proj, ((0, Vp - V), (0, 0)))      # padded rows never selected

    return {
        "emb_proj": emb_proj.astype(jnp.bfloat16),                                    # (Vp, 4H)
        "b_gates": (b_ih + b_hh)[None, :],                                            # (1, 4H) f32
        "w_hh_t": w_hh.T.astype(jnp.bfloat16),                                        # (H, 4H)
        "w_head_t": jnp.concatenate([w_mu.T, w_ls.T], axis=1).astype(jnp.bfloat16),   # (H, 2O)
        "b_head": jnp.concatenate([b_mu, b_ls])[None, :],                             # (1, 2O) f32
    }


def _reference_forward(src_seq, hidden, params, eps):
    """Pure-jnp replica (same packed params / precision) for validation."""
    B, S = src_seq.shape
    H = params["w_hh_t"].shape[0]
    O = params["w_head_t"].shape[1] // 2
    x = params["emb_proj"][src_seq].astype(jnp.float32) + params["b_gates"]  # (B, S, 4H)
    h = hidden[0][0]
    c = hidden[1][0]
    for t in range(S):
        gates = x[:, t, :] + jnp.dot(h.astype(jnp.bfloat16), params["w_hh_t"],
                                     preferred_element_type=jnp.float32)
        i_g = _sigmoid(gates[:, :H])
        f_g = _sigmoid(gates[:, H:2 * H])
        g_g = jnp.tanh(gates[:, 2 * H:3 * H])
        o_g = _sigmoid(gates[:, 3 * H:])
        c = f_g * c + i_g * g_g
        h = o_g * jnp.tanh(c)
    head = jnp.dot(h.astype(jnp.bfloat16), params["w_head_t"],
                   preferred_element_type=jnp.float32) + params["b_head"]
    mu = head[:, :O]
    sigma = jnp.exp(head[:, O:])
    z = mu + sigma * eps
    return z[None], c[None]


if __name__ == "__main__":
    # Small shapes consistent with the module.
    n_src_vocab = 50
    d_word_vec = 32
    d_inner_hid = 32
    d_out_hid = 32
    n_layers = 1
    batch = 2
    seq = 8

    key = jax.random.PRNGKey(0)
    k_par, k_tok, k_eps = jax.random.split(key, 3)

    params = init_params(k_par, n_src_vocab, d_word_vec, d_inner_hid, d_out_hid)

    src_seq = jax.random.randint(k_tok, (batch, seq), 0, n_src_vocab, dtype=jnp.int32)

    # init_hidden(batch)
    h0 = jnp.zeros((n_layers, batch, d_inner_hid), jnp.float32)
    c0 = jnp.zeros((n_layers, batch, d_inner_hid), jnp.float32)

    # np.random.normal replaced by deterministic jax.random normal noise.
    eps = jax.random.normal(k_eps, (batch, d_out_hid), jnp.float32)

    z, c = encoder_forward(src_seq, (h0, c0), params, eps)
    jax.block_until_ready((z, c))

    assert z.shape == (n_layers, batch, d_out_hid)
    assert c.shape == (n_layers, batch, d_inner_hid)

    # Validate against a pure-JAX replica (same packed params / precision).
    z_ref, c_ref = _reference_forward(src_seq, (h0, c0), params, eps)
    assert jnp.allclose(z, z_ref, atol=1e-2, rtol=1e-2), "z mismatch vs reference"
    assert jnp.allclose(c, c_ref, atol=1e-2, rtol=1e-2), "c mismatch vs reference"

    # TODO(synk): dropout is treated as identity (eval mode); training-mode
    # stochastic dropout is not implemented in the kernel.
    print("KERNEL_OK")
</pallas_src>

<mosaic_0001>
module attributes {stable_mosaic.version = 11 : i64} {
  func.func @kernel(%arg0: memref<64x1xi32, #tpu.memory_space<vmem>>, %arg1: memref<128x128xbf16, #tpu.memory_space<vmem>>, %arg2: memref<1x128xf32, #tpu.memory_space<vmem>>, %arg3: memref<32x128xbf16, #tpu.memory_space<vmem>>, %arg4: memref<32x64xbf16, #tpu.memory_space<vmem>>, %arg5: memref<1x64xf32, #tpu.memory_space<vmem>>, %arg6: memref<8x32xf32, #tpu.memory_space<vmem>>, %arg7: memref<8x32xf32, #tpu.memory_space<vmem>>, %arg8: memref<8x32xf32, #tpu.memory_space<vmem>>, %arg9: memref<8x32xf32, #tpu.memory_space<vmem>>, %arg10: memref<8x32xf32, #tpu.memory_space<vmem>>, %arg11: memref<64x128xf32, #tpu.memory_space<vmem>>) attributes {dimension_semantics = [], scalar_prefetch = 0 : i64, scratch_operands = 1 : i64, tpu.core_type = #tpu.core_type<tc>} {
    %c0 = arith.constant 0 : index
    %c0_0 = arith.constant 0 : index
    %0 = vector.load %arg0[%c0, %c0_0] : memref<64x1xi32, #tpu.memory_space<vmem>>, vector<64x1xi32>
    %1 = tpu.iota {dimensions = array<i32: 1>} : vector<64x128xi32>
    %2 = vector.broadcast %0 : vector<64x1xi32> to vector<64x128xi32>
    %3 = arith.cmpi eq, %1, %2 : vector<64x128xi32>
    %4 = arith.extui %3 : vector<64x128xi1> to vector<64x128xi32>
    %5 = arith.sitofp %4 : vector<64x128xi32> to vector<64x128xf32>
    %6 = arith.truncf %5 : vector<64x128xf32> to vector<64x128xbf16>
    %c0_1 = arith.constant 0 : index
    %c0_2 = arith.constant 0 : index
    %7 = vector.load %arg1[%c0_1, %c0_2] : memref<128x128xbf16, #tpu.memory_space<vmem>>, vector<128x128xbf16>
    %cst = arith.constant dense<0.000000e+00> : vector<64x128xf32>
    %8 = tpu.matmul %6, %7, %cst {dimension_numbers = #tpu.dot_dimension_numbers<[1], [0], [0], [1], [0, 0, 1, 1], [], []>} : vector<64x128xbf16>, vector<128x128xbf16>, vector<64x128xf32> -> vector<64x128xf32>
    %c0_3 = arith.constant 0 : index
    %c0_4 = arith.constant 0 : index
    %9 = vector.load %arg2[%c0_3, %c0_4] : memref<1x128xf32, #tpu.memory_space<vmem>>, vector<1x128xf32>
    %10 = vector.broadcast %9 : vector<1x128xf32> to vector<64x128xf32>
    %11 = arith.addf %8, %10 : vector<64x128xf32>
    %c0_5 = arith.constant 0 : index
    %c0_6 = arith.constant 0 : index
    %12 = vector.load %arg11[%c0_5, %c0_6] : memref<64x128xf32, #tpu.memory_space<vmem>>, vector<64x128xf32>
    tpu.vector_store %arg11[%c0_5, %c0_6], %11 {strides = array<i32>} : memref<64x128xf32, #tpu.memory_space<vmem>>, vector<64x128xf32>,
    %c0_7 = arith.constant 0 : index
    %c0_8 = arith.constant 0 : index
    %13 = vector.load %arg3[%c0_7, %c0_8] : memref<32x128xbf16, #tpu.memory_space<vmem>>, vector<32x128xbf16>
    %c0_9 = arith.constant 0 : index
    %c0_10 = arith.constant 0 : index
    %14 = vector.load %arg7[%c0_9, %c0_10] : memref<8x32xf32, #tpu.memory_space<vmem>>, vector<8x32xf32>
    %c0_11 = arith.constant 0 : index
    %c0_12 = arith.constant 0 : index
    %15 = vector.load %arg8[%c0_11, %c0_12] : memref<8x32xf32, #tpu.memory_space<vmem>>, vector<8x32xf32>
    %c0_i32 = arith.constant 0 : i32
    %c8_i32 = arith.constant 8 : i32
    %16 = arith.muli %c0_i32, %c8_i32 : i32
    %17 = tpu.assume_multiple %16, 8 : i32
    %18 = arith.index_cast %17 : i32 to index
    %c0_13 = arith.constant 0 : index
    %19 = vector.load %arg11[%18, %c0_13] : memref<64x128xf32, #tpu.memory_space<vmem>>, vector<8x128xf32>
    %20 = arith.truncf %14 : vector<8x32xf32> to vector<8x32xbf16>
    %cst_14 = arith.constant dense<0.000000e+00> : vector<8x128xf32>
    %21 = tpu.matmul %20, %13, %cst_14 {dimension_numbers = #tpu.dot_dimension_numbers<[1], [0], [0], [1], [0, 0, 1, 1], [], []>} : vector<8x32xbf16>, vector<32x128xbf16>, vector<8x128xf32> -> vector<8x128xf32>
    %22 = arith.addf %19, %21 : vector<8x128xf32>
    %cst_15 = arith.constant 0.000000e+00 : f32
    %23 = vector.broadcast %cst_15 : f32 to vector<8x128xf32>
    %24 = arith.subf %23, %22 : vector<8x128xf32>
    %25 = math.exp %24 : vector<8x128xf32>
    %cst_16 = arith.constant 1.000000e+00 : f32
    %26 = vector.broadcast %cst_16 : f32 to vector<8x128xf32>
    %27 = arith.addf %26, %25 : vector<8x128xf32>
    %cst_17 = arith.constant 1.000000e+00 : f32
    %28 = vector.broadcast %cst_17 : f32 to vector<8x128xf32>
    %29 = arith.divf %28, %27 : vector<8x128xf32>
    %30 = math.tanh %22 : vector<8x128xf32>
    %31 = vector.extract_strided_slice %29 {offsets = [0, 0], sizes = [8, 32], strides = [1, 1]} : vector<8x128xf32> to vector<8x32xf32>
    %32 = vector.extract_strided_slice %29 {offsets = [0, 32], sizes = [8, 32], strides = [1, 1]} : vector<8x128xf32> to vector<8x32xf32>
    %33 = vector.extract_strided_slice %30 {offsets = [0, 64], sizes = [8, 32], strides = [1, 1]} : vector<8x128xf32> to vector<8x32xf32>
    %34 = vector.extract_strided_slice %29 {offsets = [0, 96], sizes = [8, 32], strides = [1, 1]} : vector<8x128xf32> to vector<8x32xf32>
    %35 = arith.mulf %32, %15 : vector<8x32xf32>
    %36 = arith.mulf %31, %33 : vector<8x32xf32>
    %37 = arith.addf %35, %36 : vector<8x32xf32>
    %38 = math.tanh %37 : vector<8x32xf32>
    %39 = arith.mulf %34, %38 : vector<8x32xf32>
    %c1_i32 = arith.constant 1 : i32
    %c8_i32_18 = arith.constant 8 : i32
    %40 = arith.muli %c1_i32, %c8_i32_18 : i32
    %41 = tpu.assume_multiple %40, 8 : i32
    %42 = arith.index_cast %41 : i32 to index
    %c0_19 = arith.constant 0 : index
    %43 = vector.load %arg11[%42, %c0_19] : memref<64x128xf32, #tpu.memory_space<vmem>>, vector<8x128xf32>
    %44 = arith.truncf %39 : vector<8x32xf32> to vector<8x32xbf16>
    %cst_20 = arith.constant dense<0.000000e+00> : vector<8x128xf32>
    %45 = tpu.matmul %44, %13, %cst_20 {dimension_numbers = #tpu.dot_dimension_numbers<[1], [0], [0], [1], [0, 0, 1, 1], [], []>} : vector<8x32xbf16>, vector<32x128xbf16>, vector<8x128xf32> -> vector<8x128xf32>
    %46 = arith.addf %43, %45 : vector<8x128xf32>
    %cst_21 = arith.constant 0.000000e+00 : f32
    %47 = vector.broadcast %cst_21 : f32 to vector<8x128xf32>
    %48 = arith.subf %47, %46 : vector<8x128xf32>
    %49 = math.exp %48 : vector<8x128xf32>
    %cst_22 = arith.constant 1.000000e+00 : f32
    %50 = vector.broadcast %cst_22 : f32 to vector<8x128xf32>
    %51 = arith.addf %50, %49 : vector<8x128xf32>
    %cst_23 = arith.constant 1.000000e+00 : f32
    %52 = vector.broadcast %cst_23 : f32 to vector<8x128xf32>
    %53 = arith.divf %52, %51 : vector<8x128xf32>
    %54 = math.tanh %46 : vector<8x128xf32>
    %55 = vector.extract_strided_slice %53 {offsets = [0, 0], sizes = [8, 32], strides = [1, 1]} : vector<8x128xf32> to vector<8x32xf32>
    %56 = vector.extract_strided_slice %53 {offsets = [0, 32], sizes = [8, 32], strides = [1, 1]} : vector<8x128xf32> to vector<8x32xf32>
    %57 = vector.extract_strided_slice %54 {offsets = [0, 64], sizes = [8, 32], strides = [1, 1]} : vector<8x128xf32> to vector<8x32xf32>
    %58 = vector.extract_strided_slice %53 {offsets = [0, 96], sizes = [8, 32], strides = [1, 1]} : vector<8x128xf32> to vector<8x32xf32>
    %59 = arith.mulf %56, %37 : vector<8x32xf32>
    %60 = arith.mulf %55, %57 : vector<8x32xf32>
    %61 = arith.addf %59, %60 : vector<8x32xf32>
    %62 = math.tanh %61 : vector<8x32xf32>
    %63 = arith.mulf %58, %62 : vector<8x32xf32>
    %c2_i32 = arith.constant 2 : i32
    %c8_i32_24 = arith.constant 8 : i32
    %64 = arith.muli %c2_i32, %c8_i32_24 : i32
    %65 = tpu.assume_multiple %64, 8 : i32
    %66 = arith.index_cast %65 : i32 to index
    %c0_25 = arith.constant 0 : index
    %67 = vector.load %arg11[%66, %c0_25] : memref<64x128xf32, #tpu.memory_space<vmem>>, vector<8x128xf32>
    %68 = arith.truncf %63 : vector<8x32xf32> to vector<8x32xbf16>
    %cst_26 = arith.constant dense<0.000000e+00> : vector<8x128xf32>
    %69 = tpu.matmul %68, %13, %cst_26 {dimension_numbers = #tpu.dot_dimension_numbers<[1], [0], [0], [1], [0, 0, 1, 1], [], []>} : vector<8x32xbf16>, vector<32x128xbf16>, vector<8x128xf32> -> vector<8x128xf32>
    %70 = arith.addf %67, %69 : vector<8x128xf32>
    %cst_27 = arith.constant 0.000000e+00 : f32
    %71 = vector.broadcast %cst_27 : f32 to vector<8x128xf32>
    %72 = arith.subf %71, %70 : vector<8x128xf32>
    %73 = math.exp %72 : vector<8x128xf32>
    %cst_28 = arith.constant 1.000000e+00 : f32
    %74 = vector.broadcast %cst_28 : f32 to vector<8x128xf32>
    %75 = arith.addf %74, %73 : vector<8x128xf32>
    %cst_29 = arith.constant 1.000000e+00 : f32
    %76 = vector.broadcast %cst_29 : f32 to vector<8x128xf32>
    %77 = arith.divf %76, %75 : vector<8x128xf32>
    %78 = math.tanh %70 : vector<8x128xf32>
    %79 = vector.extract_strided_slice %77 {offsets = [0, 0], sizes = [8, 32], strides = [1, 1]} : vector<8x128xf32> to vector<8x32xf32>
    %80 = vector.extract_strided_slice %77 {offsets = [0, 32], sizes = [8, 32], strides = [1, 1]} : vector<8x128xf32> to vector<8x32xf32>
    %81 = vector.extract_strided_slice %78 {offsets = [0, 64], sizes = [8, 32], strides = [1, 1]} : vector<8x128xf32> to vector<8x32xf32>
    %82 = vector.extract_strided_slice %77 {offsets = [0, 96], sizes = [8, 32], strides = [1, 1]} : vector<8x128xf32> to vector<8x32xf32>
    %83 = arith.mulf %80, %61 : vector<8x32xf32>
    %84 = arith.mulf %79, %81 : vector<8x32xf32>
    %85 = arith.addf %83, %84 : vector<8x32xf32>
    %86 = math.tanh %85 : vector<8x32xf32>
    %87 = arith.mulf %82, %86 : vector<8x32xf32>
    %c3_i32 = arith.constant 3 : i32
    %c8_i32_30 = arith.constant 8 : i32
    %88 = arith.muli %c3_i32, %c8_i32_30 : i32
    %89 = tpu.assume_multiple %88, 8 : i32
    %90 = arith.index_cast %89 : i32 to index
    %c0_31 = arith.constant 0 : index
    %91 = vector.load %arg11[%90, %c0_31] : memref<64x128xf32, #tpu.memory_space<vmem>>, vector<8x128xf32>
    %92 = arith.truncf %87 : vector<8x32xf32> to vector<8x32xbf16>
    %cst_32 = arith.constant dense<0.000000e+00> : vector<8x128xf32>
    %93 = tpu.matmul %92, %13, %cst_32 {dimension_numbers = #tpu.dot_dimension_numbers<[1], [0], [0], [1], [0, 0, 1, 1], [], []>} : vector<8x32xbf16>, vector<32x128xbf16>, vector<8x128xf32> -> vector<8x128xf32>
    %94 = arith.addf %91, %93 : vector<8x128xf32>
    %cst_33 = arith.constant 0.000000e+00 : f32
    %95 = vector.broadcast %cst_33 : f32 to vector<8x128xf32>
    %96 = arith.subf %95, %94 : vector<8x128xf32>
    %97 = math.exp %96 : vector<8x128xf32>
    %cst_34 = arith.constant 1.000000e+00 : f32
    %98 = vector.broadcast %cst_34 : f32 to vector<8x128xf32>
    %99 = arith.addf %98, %97 : vector<8x128xf32>
    %cst_35 = arith.constant 1.000000e+00 : f32
    %100 = vector.broadcast %cst_35 : f32 to vector<8x128xf32>
    %101 = arith.divf %100, %99 : vector<8x128xf32>
    %102 = math.tanh %94 : vector<8x128xf32>
    %103 = vector.extract_strided_slice %101 {offsets = [0, 0], sizes = [8, 32], strides = [1, 1]} : vector<8x128xf32> to vector<8x32xf32>
    %104 = vector.extract_strided_slice %101 {offsets = [0, 32], sizes = [8, 32], strides = [1, 1]} : vector<8x128xf32> to vector<8x32xf32>
    %105 = vector.extract_strided_slice %102 {offsets = [0, 64], sizes = [8, 32], strides = [1, 1]} : vector<8x128xf32> to vector<8x32xf32>
    %106 = vector.extract_strided_slice %101 {offsets = [0, 96], sizes = [8, 32], strides = [1, 1]} : vector<8x128xf32> to vector<8x32xf32>
    %107 = arith.mulf %104, %85 : vector<8x32xf32>
    %108 = arith.mulf %103, %105 : vector<8x32xf32>
    %109 = arith.addf %107, %108 : vector<8x32xf32>
    %110 = math.tanh %109 : vector<8x32xf32>
    %111 = arith.mulf %106, %110 : vector<8x32xf32>
    %c4_i32 = arith.constant 4 : i32
    %c8_i32_36 = arith.constant 8 : i32
    %112 = arith.muli %c4_i32, %c8_i32_36 : i32
    %113 = tpu.assume_multiple %112, 8 : i32
    %114 = arith.index_cast %113 : i32 to index
    %c0_37 = arith.constant 0 : index
    %115 = vector.load %arg11[%114, %c0_37] : memref<64x128xf32, #tpu.memory_space<vmem>>, vector<8x128xf32>
    %116 = arith.truncf %111 : vector<8x32xf32> to vector<8x32xbf16>
    %cst_38 = arith.constant dense<0.000000e+00> : vector<8x128xf32>
    %117 = tpu.matmul %116, %13, %cst_38 {dimension_numbers = #tpu.dot_dimension_numbers<[1], [0], [0], [1], [0, 0, 1, 1], [], []>} : vector<8x32xbf16>, vector<32x128xbf16>, vector<8x128xf32> -> vector<8x128xf32>
    %118 = arith.addf %115, %117 : vector<8x128xf32>
    %cst_39 = arith.constant 0.000000e+00 : f32
    %119 = vector.broadcast %cst_39 : f32 to vector<8x128xf32>
    %120 = arith.subf %119, %118 : vector<8x128xf32>
    %121 = math.exp %120 : vector<8x128xf32>
    %cst_40 = arith.constant 1.000000e+00 : f32
    %122 = vector.broadcast %cst_40 : f32 to vector<8x128xf32>
    %123 = arith.addf %122, %121 : vector<8x128xf32>
    %cst_41 = arith.constant 1.000000e+00 : f32
    %124 = vector.broadcast %cst_41 : f32 to vector<8x128xf32>
    %125 = arith.divf %124, %123 : vector<8x128xf32>
    %126 = math.tanh %118 : vector<8x128xf32>
    %127 = vector.extract_strided_slice %125 {offsets = [0, 0], sizes = [8, 32], strides = [1, 1]} : vector<8x128xf32> to vector<8x32xf32>
    %128 = vector.extract_strided_slice %125 {offsets = [0, 32], sizes = [8, 32], strides = [1, 1]} : vector<8x128xf32> to vector<8x32xf32>
    %129 = vector.extract_strided_slice %126 {offsets = [0, 64], sizes = [8, 32], strides = [1, 1]} : vector<8x128xf32> to vector<8x32xf32>
    %130 = vector.extract_strided_slice %125 {offsets = [0, 96], sizes = [8, 32], strides = [1, 1]} : vector<8x128xf32> to vector<8x32xf32>
    %131 = arith.mulf %128, %109 : vector<8x32xf32>
    %132 = arith.mulf %127, %129 : vector<8x32xf32>
    %133 = arith.addf %131, %132 : vector<8x32xf32>
    %134 = math.tanh %133 : vector<8x32xf32>
    %135 = arith.mulf %130, %134 : vector<8x32xf32>
    %c5_i32 = arith.constant 5 : i32
    %c8_i32_42 = arith.constant 8 : i32
    %136 = arith.muli %c5_i32, %c8_i32_42 : i32
    %137 = tpu.assume_multiple %136, 8 : i32
    %138 = arith.index_cast %137 : i32 to index
    %c0_43 = arith.constant 0 : index
    %139 = vector.load %arg11[%138, %c0_43] : memref<64x128xf32, #tpu.memory_space<vmem>>, vector<8x128xf32>
    %140 = arith.truncf %135 : vector<8x32xf32> to vector<8x32xbf16>
    %cst_44 = arith.constant dense<0.000000e+00> : vector<8x128xf32>
    %141 = tpu.matmul %140, %13, %cst_44 {dimension_numbers = #tpu.dot_dimension_numbers<[1], [0], [0], [1], [0, 0, 1, 1], [], []>} : vector<8x32xbf16>, vector<32x128xbf16>, vector<8x128xf32> -> vector<8x128xf32>
    %142 = arith.addf %139, %141 : vector<8x128xf32>
    %cst_45 = arith.constant 0.000000e+00 : f32
    %143 = vector.broadcast %cst_45 : f32 to vector<8x128xf32>
    %144 = arith.subf %143, %142 : vector<8x128xf32>
    %145 = math.exp %144 : vector<8x128xf32>
    %cst_46 = arith.constant 1.000000e+00 : f32
    %146 = vector.broadcast %cst_46 : f32 to vector<8x128xf32>
    %147 = arith.addf %146, %145 : vector<8x128xf32>
    %cst_47 = arith.constant 1.000000e+00 : f32
    %148 = vector.broadcast %cst_47 : f32 to vector<8x128xf32>
    %149 = arith.divf %148, %147 : vector<8x128xf32>
    %150 = math.tanh %142 : vector<8x128xf32>
    %151 = vector.extract_strided_slice %149 {offsets = [0, 0], sizes = [8, 32], strides = [1, 1]} : vector<8x128xf32> to vector<8x32xf32>
    %152 = vector.extract_strided_slice %149 {offsets = [0, 32], sizes = [8, 32], strides = [1, 1]} : vector<8x128xf32> to vector<8x32xf32>
    %153 = vector.extract_strided_slice %150 {offsets = [0, 64], sizes = [8, 32], strides = [1, 1]} : vector<8x128xf32> to vector<8x32xf32>
    %154 = vector.extract_strided_slice %149 {offsets = [0, 96], sizes = [8, 32], strides = [1, 1]} : vector<8x128xf32> to vector<8x32xf32>
    %155 = arith.mulf %152, %133 : vector<8x32xf32>
    %156 = arith.mulf %151, %153 : vector<8x32xf32>
    %157 = arith.addf %155, %156 : vector<8x32xf32>
    %158 = math.tanh %157 : vector<8x32xf32>
    %159 = arith.mulf %154, %158 : vector<8x32xf32>
    %c6_i32 = arith.constant 6 : i32
    %c8_i32_48 = arith.constant 8 : i32
    %160 = arith.muli %c6_i32, %c8_i32_48 : i32
    %161 = tpu.assume_multiple %160, 8 : i32
    %162 = arith.index_cast %161 : i32 to index
    %c0_49 = arith.constant 0 : index
    %163 = vector.load %arg11[%162, %c0_49] : memref<64x128xf32, #tpu.memory_space<vmem>>, vector<8x128xf32>
    %164 = arith.truncf %159 : vector<8x32xf32> to vector<8x32xbf16>
    %cst_50 = arith.constant dense<0.000000e+00> : vector<8x128xf32>
    %165 = tpu.matmul %164, %13, %cst_50 {dimension_numbers = #tpu.dot_dimension_numbers<[1], [0], [0], [1], [0, 0, 1, 1], [], []>} : vector<8x32xbf16>, vector<32x128xbf16>, vector<8x128xf32> -> vector<8x128xf32>
    %166 = arith.addf %163, %165 : vector<8x128xf32>
    %cst_51 = arith.constant 0.000000e+00 : f32
    %167 = vector.broadcast %cst_51 : f32 to vector<8x128xf32>
    %168 = arith.subf %167, %166 : vector<8x128xf32>
    %169 = math.exp %168 : vector<8x128xf32>
    %cst_52 = arith.constant 1.000000e+00 : f32
    %170 = vector.broadcast %cst_52 : f32 to vector<8x128xf32>
    %171 = arith.addf %170, %169 : vector<8x128xf32>
    %cst_53 = arith.constant 1.000000e+00 : f32
    %172 = vector.broadcast %cst_53 : f32 to vector<8x128xf32>
    %173 = arith.divf %172, %171 : vector<8x128xf32>
    %174 = math.tanh %166 : vector<8x128xf32>
    %175 = vector.extract_strided_slice %173 {offsets = [0, 0], sizes = [8, 32], strides = [1, 1]} : vector<8x128xf32> to vector<8x32xf32>
    %176 = vector.extract_strided_slice %173 {offsets = [0, 32], sizes = [8, 32], strides = [1, 1]} : vector<8x128xf32> to vector<8x32xf32>
    %177 = vector.extract_strided_slice %174 {offsets = [0, 64], sizes = [8, 32], strides = [1, 1]} : vector<8x128xf32> to vector<8x32xf32>
    %178 = vector.extract_strided_slice %173 {offsets = [0, 96], sizes = [8, 32], strides = [1, 1]} : vector<8x128xf32> to vector<8x32xf32>
    %179 = arith.mulf %176, %157 : vector<8x32xf32>
    %180 = arith.mulf %175, %177 : vector<8x32xf32>
    %181 = arith.addf %179, %180 : vector<8x32xf32>
    %182 = math.tanh %181 : vector<8x32xf32>
    %183 = arith.mulf %178, %182 : vector<8x32xf32>
    %c7_i32 = arith.constant 7 : i32
    %c8_i32_54 = arith.constant 8 : i32
    %184 = arith.muli %c7_i32, %c8_i32_54 : i32
    %185 = tpu.assume_multiple %184, 8 : i32
    %186 = arith.index_cast %185 : i32 to index
    %c0_55 = arith.constant 0 : index
    %187 = vector.load %arg11[%186, %c0_55] : memref<64x128xf32, #tpu.memory_space<vmem>>, vector<8x128xf32>
    %188 = arith.truncf %183 : vector<8x32xf32> to vector<8x32xbf16>
    %cst_56 = arith.constant dense<0.000000e+00> : vector<8x128xf32>
    %189 = tpu.matmul %188, %13, %cst_56 {dimension_numbers = #tpu.dot_dimension_numbers<[1], [0], [0], [1], [0, 0, 1, 1], [], []>} : vector<8x32xbf16>, vector<32x128xbf16>, vector<8x128xf32> -> vector<8x128xf32>
    %190 = arith.addf %187, %189 : vector<8x128xf32>
    %cst_57 = arith.constant 0.000000e+00 : f32
    %191 = vector.broadcast %cst_57 : f32 to vector<8x128xf32>
    %192 = arith.subf %191, %190 : vector<8x128xf32>
    %193 = math.exp %192 : vector<8x128xf32>
    %cst_58 = arith.constant 1.000000e+00 : f32
    %194 = vector.broadcast %cst_58 : f32 to vector<8x128xf32>
    %195 = arith.addf %194, %193 : vector<8x128xf32>
    %cst_59 = arith.constant 1.000000e+00 : f32
    %196 = vector.broadcast %cst_59 : f32 to vector<8x128xf32>
    %197 = arith.divf %196, %195 : vector<8x128xf32>
    %198 = math.tanh %190 : vector<8x128xf32>
    %199 = vector.extract_strided_slice %197 {offsets = [0, 0], sizes = [8, 32], strides = [1, 1]} : vector<8x128xf32> to vector<8x32xf32>
    %200 = vector.extract_strided_slice %197 {offsets = [0, 32], sizes = [8, 32], strides = [1, 1]} : vector<8x128xf32> to vector<8x32xf32>
    %201 = vector.extract_strided_slice %198 {offsets = [0, 64], sizes = [8, 32], strides = [1, 1]} : vector<8x128xf32> to vector<8x32xf32>
    %202 = vector.extract_strided_slice %197 {offsets = [0, 96], sizes = [8, 32], strides = [1, 1]} : vector<8x128xf32> to vector<8x32xf32>
    %203 = arith.mulf %200, %181 : vector<8x32xf32>
    %204 = arith.mulf %199, %201 : vector<8x32xf32>
    %205 = arith.addf %203, %204 : vector<8x32xf32>
    %206 = math.tanh %205 : vector<8x32xf32>
    %207 = arith.mulf %202, %206 : vector<8x32xf32>
    %c8_i32_60 = arith.constant 8 : i32
    %208 = arith.truncf %207 : vector<8x32xf32> to vector<8x32xbf16>
    %c0_61 = arith.constant 0 : index
    %c0_62 = arith.constant 0 : index
    %209 = vector.load %arg4[%c0_61, %c0_62] : memref<32x64xbf16, #tpu.memory_space<vmem>>, vector<32x64xbf16>
    %cst_63 = arith.constant dense<0.000000e+00> : vector<8x64xf32>
    %210 = tpu.matmul %208, %209, %cst_63 {dimension_numbers = #tpu.dot_dimension_numbers<[1], [0], [0], [1], [0, 0, 1, 1], [], []>} : vector<8x32xbf16>, vector<32x64xbf16>, vector<8x64xf32> -> vector<8x64xf32>
    %c0_64 = arith.constant 0 : index
    %c0_65 = arith.constant 0 : index
    %211 = vector.load %arg5[%c0_64, %c0_65] : memref<1x64xf32, #tpu.memory_space<vmem>>, vector<1x64xf32>
    %212 = vector.broadcast %211 : vector<1x64xf32> to vector<8x64xf32>
    %213 = arith.addf %210, %212 : vector<8x64xf32>
    %214 = vector.extract_strided_slice %213 {offsets = [0, 0], sizes = [8, 32], strides = [1, 1]} : vector<8x64xf32> to vector<8x32xf32>
    %215 = vector.extract_strided_slice %213 {offsets = [0, 32], sizes = [8, 32], strides = [1, 1]} : vector<8x64xf32> to vector<8x32xf32>
    %216 = math.exp %215 : vector<8x32xf32>
    %c0_66 = arith.constant 0 : index
    %c0_67 = arith.constant 0 : index
    %217 = vector.load %arg6[%c0_66, %c0_67] : memref<8x32xf32, #tpu.memory_space<vmem>>, vector<8x32xf32>
    %218 = arith.mulf %216, %217 : vector<8x32xf32>
    %219 = arith.addf %214, %218 : vector<8x32xf32>
    %c0_68 = arith.constant 0 : index
    %c0_69 = arith.constant 0 : index
    %220 = vector.load %arg9[%c0_68, %c0_69] : memref<8x32xf32, #tpu.memory_space<vmem>>, vector<8x32xf32>
    tpu.vector_store %arg9[%c0_68, %c0_69], %219 {strides = array<i32>} : memref<8x32xf32, #tpu.memory_space<vmem>>, vector<8x32xf32>,
    %c0_70 = arith.constant 0 : index
    %c0_71 = arith.constant 0 : index
    %221 = vector.load %arg10[%c0_70, %c0_71] : memref<8x32xf32, #tpu.memory_space<vmem>>, vector<8x32xf32>
    tpu.vector_store %arg10[%c0_70, %c0_71], %205 {strides = array<i32>} : memref<8x32xf32, #tpu.memory_space<vmem>>, vector<8x32xf32>,
    return
  }
}

</mosaic_0001>

<llo_original>
// kernel: tpu_custom_call.1
$region0: #{tpu_custom_call.1}
  #allocation0 [shape = 'u32[]', space=smem, size = 0x4, offset = 0x4, fixed_abs, tag = 'smem constant byte address 0x4 - core index']
  #allocation1 [shape = 'u32[144,128]{1,0:T(1,128)}', space=vmem, size = 0x12000, scoped, tag = 'internal scratch']
  #allocation2 [shape = 'f32[64,128]{1,0:T(8,128)}', space=vmem, size = 0x8000, scoped, tag = 'scratch operand']
  %s0 = inlined_call_operand.vmem [shape: s32[64,1], index: 0, kind: input, shape index: {}]
  %s1 = inlined_call_operand.vmem [shape: bf16[128,128], index: 1, kind: input, shape index: {}]
  %s2 = inlined_call_operand.hbm [shape: f32[1,128], index: 2, kind: input, shape index: {}]
  %s3 = inlined_call_operand.hbm [shape: bf16[32,128], index: 3, kind: input, shape index: {}]
  %s4 = inlined_call_operand.vmem [shape: bf16[32,64], index: 4, kind: input, shape index: {}]
  %s5 = inlined_call_operand.vmem [shape: f32[1,64], index: 5, kind: input, shape index: {}]
  %s6 = inlined_call_operand.hbm [shape: f32[8,32], index: 6, kind: input, shape index: {}]
  %s7 = inlined_call_operand.vmem [shape: f32[8,32], index: 7, kind: input, shape index: {}]
  %s8 = inlined_call_operand.hbm [shape: f32[8,32], index: 8, kind: input, shape index: {}]
  %s9 = inlined_call_operand.hbm [shape: f32[8,32], index: 9, kind: output, shape index: {0}]
  %s10 = inlined_call_operand.hbm [shape: f32[8,32], index: 10, kind: output, shape index: {1}]
  %11 = xla_tuple %s9, %s10
  %s12 = sld [smem:[#allocation0]]
  $region70: #{tpu_custom_call.1} parent=0
    _
  %s14 = ssub.s32 1, %s12
  %s15 = scalar_select 0, %s14, %s12
  $region1: #{tpu_custom_call.1} parent=0
    #allocation3 [shape = 'u8[512]{0}', space=vmem, size = 0x400, scoped, tag = 'input window, operand 2, single buffered']
    #allocation4 [shape = 's32[1]{0}', space=sflag, size = 0x4, scoped, tag = 'scoped memory for tpu_custom_call.1']
    #allocation5 [shape = 's32[1]{0}', space=sflag, size = 0x4, scoped, tag = 'scoped memory for tpu_custom_call.1']
    #allocation6 [shape = 'u8[8192]{0}', space=vmem, size = 0x2000, scoped, tag = 'input window, operand 3, single buffered']
    #allocation7 [shape = 's32[1]{0}', space=sflag, size = 0x4, scoped, tag = 'scoped memory for tpu_custom_call.1']
    #allocation8 [shape = 'u8[4096]{0}', space=vmem, size = 0x1000, scoped, tag = 'input window, operand 6, single buffered']
    #allocation9 [shape = 'u8[4096]{0}', space=vmem, size = 0x1000, scoped, tag = 'input window, operand 8, single buffered']
    #allocation10 [shape = 's32[1]{0}', space=sflag, size = 0x4, scoped, tag = 'scoped memory for tpu_custom_call.1']
    #allocation11 [shape = 'u8[4096]{0}', space=vmem, size = 0x1000, scoped, tag = 'output window, operand 0, single buffered']
    #allocation12 [shape = 'u8[4096]{0}', space=vmem, size = 0x1000, scoped, tag = 'output window, operand 1, single buffered']
    #allocation13 [shape = 's32[1]{0}', space=sflag, size = 0x4, scoped, tag = 'scoped memory for tpu_custom_call.1']
    %16 = vsyncpa [#allocation4], 0
    %17 = vsyncpa [#allocation7], 0
    %18 = vsyncpa [#allocation10], 0
    %19 = vsyncpa [#allocation5], 0
    %20 = vsyncpa [#allocation13], 0
    // Predicated region
    $region2: #{tpu_custom_call.1} parent=1 // pred_check
      _
    $region3: #{tpu_custom_call.1} parent=1 // pred_check_branch
      %22 = sbr.rel (0) target = $region5
    $region4: #{tpu_custom_call.1} parent=1 // pred_region
      _
    $region5: #{tpu_custom_call.1} parent=1 // pred_fallthru
      _
    // Predicated region
    $region6: #{tpu_custom_call.1} parent=1 // pred_check
      _
    $region7: #{tpu_custom_call.1} parent=1 // pred_check_branch
      %24 = sbr.rel (0) target = $region9
    $region8: #{tpu_custom_call.1} parent=1 // pred_region
      _
    $region9: #{tpu_custom_call.1} parent=1 // pred_fallthru
      _
    // Predicated region
    $region10: #{tpu_custom_call.1} parent=1 // pred_check
      _
    $region11: #{tpu_custom_call.1} parent=1 // pred_check_branch
      %26 = sbr.rel (0) target = $region13
    $region12: #{tpu_custom_call.1} parent=1 // pred_region
      %s28 = ssub.s32 16, 16
      %29 = vsyncadd [#allocation4], %s28
      %s31 = sshll.u32 [#allocation3], 4
      %s32 = int_to_ptr.vmem [resolvable:$true] %s31
      %34 = dma.hbm_to_vmem [thread:$0]  %s2, 16, %s32, [#allocation4]
    $region13: #{tpu_custom_call.1} parent=1 // pred_fallthru
      _
    // Predicated region
    $region14: #{tpu_custom_call.1} parent=1 // pred_check
      _
    $region15: #{tpu_custom_call.1} parent=1 // pred_check_branch
      %36 = sbr.rel (0) target = $region17
    $region16: #{tpu_custom_call.1} parent=1 // pred_region
      %s38 = ssub.s32 256, 256
      %39 = vsyncadd [#allocation7], %s38
      %s40 = sshll.u32 [#allocation6], 4
      %s41 = int_to_ptr.vmem [resolvable:$true] %s40
      %46 = dma.hbm_to_vmem [thread:$0]  %s3, 256, %s41, [#allocation7], 64, 64, 4
    $region17: #{tpu_custom_call.1} parent=1 // pred_fallthru
      _
    // Predicated region
    $region18: #{tpu_custom_call.1} parent=1 // pred_check
      _
    $region19: #{tpu_custom_call.1} parent=1 // pred_check_branch
      %48 = sbr.rel (0) target = $region21
    $region20: #{tpu_custom_call.1} parent=1 // pred_region
      _
    $region21: #{tpu_custom_call.1} parent=1 // pred_fallthru
      _
    // Predicated region
    $region22: #{tpu_custom_call.1} parent=1 // pred_check
      _
    $region23: #{tpu_custom_call.1} parent=1 // pred_check_branch
      %50 = sbr.rel (0) target = $region25
    $region24: #{tpu_custom_call.1} parent=1 // pred_region
      _
    $region25: #{tpu_custom_call.1} parent=1 // pred_fallthru
      _
    // Predicated region
    $region26: #{tpu_custom_call.1} parent=1 // pred_check
      _
    $region27: #{tpu_custom_call.1} parent=1 // pred_check_branch
      %52 = sbr.rel (0) target = $region29
    $region28: #{tpu_custom_call.1} parent=1 // pred_region
      %s54 = ssub.s32 128, 128
      %55 = vsyncadd [#allocation7], %s54
      %s57 = sshll.u32 [#allocation8], 4
      %s58 = int_to_ptr.vmem [resolvable:$true] %s57
      %60 = dma.hbm_to_vmem [thread:$0]  %s6, 128, %s58, [#allocation7]
    $region29: #{tpu_custom_call.1} parent=1 // pred_fallthru
      _
    // Predicated region
    $region30: #{tpu_custom_call.1} parent=1 // pred_check
      _
    $region31: #{tpu_custom_call.1} parent=1 // pred_check_branch
      %62 = sbr.rel (0) target = $region33
    $region32: #{tpu_custom_call.1} parent=1 // pred_region
      _
    $region33: #{tpu_custom_call.1} parent=1 // pred_fallthru
      _
    // Predicated region
    $region34: #{tpu_custom_call.1} parent=1 // pred_check
      _
    $region35: #{tpu_custom_call.1} parent=1 // pred_check_branch
      %64 = sbr.rel (0) target = $region37
    $region36: #{tpu_custom_call.1} parent=1 // pred_region
      %s66 = ssub.s32 128, 128
      %67 = vsyncadd [#allocation10], %s66
      %s69 = sshll.u32 [#allocation9], 4
      %s70 = int_to_ptr.vmem [resolvable:$true] %s69
      %72 = dma.hbm_to_vmem [thread:$0]  %s8, 128, %s70, [#allocation10]
    $region37: #{tpu_custom_call.1} parent=1 // pred_fallthru
      _
    // Predicated region
    $region38: #{tpu_custom_call.1} parent=1 // pred_check
      _
    $region39: #{tpu_custom_call.1} parent=1 // pred_check_branch
      %74 = sbr.rel (0) target = $region41
    $region40: #{tpu_custom_call.1} parent=1 // pred_region
      %75 = dma.done [#allocation4], 16
    $region41: #{tpu_custom_call.1} parent=1 // pred_fallthru
      _
    // Predicated region
    $region42: #{tpu_custom_call.1} parent=1 // pred_check
      _
    $region43: #{tpu_custom_call.1} parent=1 // pred_check_branch
      %77 = sbr.rel (0) target = $region45
    $region44: #{tpu_custom_call.1} parent=1 // pred_region
      %78 = dma.done [#allocation7], 256
    $region45: #{tpu_custom_call.1} parent=1 // pred_fallthru
      _
    // Predicated region
    $region46: #{tpu_custom_call.1} parent=1 // pred_check
      _
    $region47: #{tpu_custom_call.1} parent=1 // pred_check_branch
      %80 = sbr.rel (0) target = $region49
    $region48: #{tpu_custom_call.1} parent=1 // pred_region
      %81 = dma.done [#allocation7], 128
    $region49: #{tpu_custom_call.1} parent=1 // pred_fallthru
      _
    // Predicated region
    $region50: #{tpu_custom_call.1} parent=1 // pred_check
      _
    $region51: #{tpu_custom_call.1} parent=1 // pred_check_branch
      %83 = sbr.rel (0) target = $region53
    $region52: #{tpu_custom_call.1} parent=1 // pred_region
      %84 = dma.done [#allocation10], 128
    $region53: #{tpu_custom_call.1} parent=1 // pred_fallthru
      _
    %v86 = vld [vmem:[%s0] sm:$0xff]
    %v87 = vld [vmem:[%s0 + $0x8] sm:$0xff]
    %v88 = vld [vmem:[%s0 + $0x10] sm:$0xff]
    %v89 = vld [vmem:[%s0 + $0x18] sm:$0xff]
    %v90 = vld [vmem:[%s0 + $0x20] sm:$0xff]
    %v91 = vld [vmem:[%s0 + $0x28] sm:$0xff]
    %v92 = vld [vmem:[%s0 + $0x30] sm:$0xff]
    %v93 = vld [vmem:[%s0 + $0x38] sm:$0xff]
    %v94 = vlaneseq
    %v95 = vand.u32 %v94, 127
    %96 = vset.pattern.permute.xlu0 0
    %97 = vperm.xlu0 %96, %v86
    %v98 = vpop.permute.xlu0 %97
    %99 = vset.pattern.permute.xlu0 0
    %100 = vperm.xlu0 %99, %v87
    %v101 = vpop.permute.xlu0 %100
    %102 = vset.pattern.permute.xlu0 0
    %103 = vperm.xlu0 %102, %v88
    %v104 = vpop.permute.xlu0 %103
    %105 = vset.pattern.permute.xlu0 0
    %106 = vperm.xlu0 %105, %v89
    %v107 = vpop.permute.xlu0 %106
    %108 = vset.pattern.permute.xlu0 0
    %109 = vperm.xlu0 %108, %v90
    %v110 = vpop.permute.xlu0 %109
    %111 = vset.pattern.permute.xlu0 0
    %112 = vperm.xlu0 %111, %v91
    %v113 = vpop.permute.xlu0 %112
    %114 = vset.pattern.permute.xlu0 0
    %115 = vperm.xlu0 %114, %v92
    %v116 = vpop.permute.xlu0 %115
    %117 = vset.pattern.permute.xlu0 0
    %118 = vperm.xlu0 %117, %v93
    %v119 = vpop.permute.xlu0 %118
    %vm120 = vcmp.eq.s32.totalorder %v95, %v98
    %vm121 = vcmp.eq.s32.totalorder %v95, %v101
    %vm122 = vcmp.eq.s32.totalorder %v95, %v104
    %vm123 = vcmp.eq.s32.totalorder %v95, %v107
    %vm124 = vcmp.eq.s32.totalorder %v95, %v110
    %vm125 = vcmp.eq.s32.totalorder %v95, %v113
    %vm126 = vcmp.eq.s32.totalorder %v95, %v116
    %vm127 = vcmp.eq.s32.totalorder %v95, %v119
    %v128 = vsel %vm120, 1, 0
    %v129 = vsel %vm121, 1, 0
    %v130 = vsel %vm122, 1, 0
    %v131 = vsel %vm123, 1, 0
    %v132 = vsel %vm124, 1, 0
    %v133 = vsel %vm125, 1, 0
    %v134 = vsel %vm126, 1, 0
    %v135 = vsel %vm127, 1, 0
    %v136 = vcvt.s32.f32 %v128
    %v137 = vcvt.s32.f32 %v129
    %v138 = vcvt.s32.f32 %v130
    %v139 = vcvt.s32.f32 %v131
    %v140 = vcvt.s32.f32 %v132
    %v141 = vcvt.s32.f32 %v133
    %v142 = vcvt.s32.f32 %v134
    %v143 = vcvt.s32.f32 %v135
    %v144 = vpack.c.bf16 %v137, %v136
    %v145 = vpack.c.bf16 %v139, %v138
    %v146 = vpack.c.bf16 %v141, %v140
    %v147 = vpack.c.bf16 %v143, %v142
    %v148 = vld [vmem:[%s1] sm:$0xf]
    %v149 = vld [vmem:[%s1 + $0x4] sm:$0xf]
    %v150 = vld [vmem:[%s1 + $0x8] sm:$0xf]
    %v151 = vld [vmem:[%s1 + $0xc] sm:$0xf]
    %v152 = vld [vmem:[%s1 + $0x10] sm:$0xf]
    %v153 = vld [vmem:[%s1 + $0x14] sm:$0xf]
    %v154 = vld [vmem:[%s1 + $0x18] sm:$0xf]
    %v155 = vld [vmem:[%s1 + $0x1c] sm:$0xf]
    %v156 = vld [vmem:[%s1 + $0x20] sm:$0xf]
    %v157 = vld [vmem:[%s1 + $0x24] sm:$0xf]
    %v158 = vld [vmem:[%s1 + $0x28] sm:$0xf]
    %v159 = vld [vmem:[%s1 + $0x2c] sm:$0xf]
    %v160 = vld [vmem:[%s1 + $0x30] sm:$0xf]
    %v161 = vld [vmem:[%s1 + $0x34] sm:$0xf]
    %v162 = vld [vmem:[%s1 + $0x38] sm:$0xf]
    %v163 = vld [vmem:[%s1 + $0x3c] sm:$0xf]
    %v164 = vld [vmem:[#allocation3] sm:$0x1]
    %v166 = vlaneseq
    %v167 = vshrl.u32 %v166, 7
    %v168 = vsub.s32 0, %v167
    %v169 = vrot.slane %v164, %v168
    %v187 = vunpack.c.l.b16 %v148
    %v188 = vunpack.c.l.b16 %v149
    %v189 = vunpack.c.l.b16 %v150
    %v190 = vunpack.c.l.b16 %v151
    %v191 = vunpack.c.l.b16 %v152
    %v192 = vunpack.c.l.b16 %v153
    %v193 = vunpack.c.l.b16 %v154
    %v194 = vunpack.c.l.b16 %v155
    %v195 = vunpack.c.l.b16 %v156
    %v196 = vunpack.c.l.b16 %v157
    %v197 = vunpack.c.l.b16 %v158
    %v198 = vunpack.c.l.b16 %v159
    %v199 = vunpack.c.l.b16 %v160
    %v200 = vunpack.c.l.b16 %v161
    %v201 = vunpack.c.l.b16 %v162
    %v202 = vunpack.c.l.b16 %v163
    %v203 = vpack.c.b16 %v188, %v187
    %v204 = vpack.c.b16 %v190, %v189
    %v205 = vpack.c.b16 %v192, %v191
    %v206 = vpack.c.b16 %v194, %v193
    %v207 = vpack.c.b16 %v196, %v195
    %v208 = vpack.c.b16 %v198, %v197
    %v209 = vpack.c.b16 %v200, %v199
    %v210 = vpack.c.b16 %v202, %v201
    %219 = vmatprep.subr.bf16.mxu0 0
    %220 = vmatpush1.bf16.msra.mxu0 %v203
    %221 = vmatprep.subr.bf16.mxu0 0
    %222 = vmatpush1.bf16.msra.mxu0 %v204
    %223 = vmatprep.subr.bf16.mxu0 0
    %224 = vmatpush1.bf16.msra.mxu0 %v205
    %225 = vmatprep.subr.bf16.mxu0 0
    %226 = vmatpush1.bf16.msra.mxu0 %v206
    %227 = vmatprep.subr.bf16.mxu0 0
    %228 = vmatpush1.bf16.msra.mxu0 %v207
    %229 = vmatprep.subr.bf16.mxu0 0
    %230 = vmatpush1.bf16.msra.mxu0 %v208
    %231 = vmatprep.subr.bf16.mxu0 0
    %232 = vmatpush1.bf16.msra.mxu0 %v209
    %233 = vmatprep.subr.bf16.mxu0 0
    %234 = vmatpush1.bf16.msra.mxu0 %v210
    %235 = vmatprep.subr.bf16.mxu0 0
    %236 = vmatpush1.bf16.msra.mxu0 0
    %237 = vmatprep.subr.bf16.mxu0 0
    %238 = vmatpush1.bf16.msra.mxu0 0
    %239 = vmatprep.subr.bf16.mxu0 0
    %240 = vmatpush1.bf16.msra.mxu0 0
    %241 = vmatprep.subr.bf16.mxu0 0
    %242 = vmatpush1.bf16.msra.mxu0 0
    %243 = vmatprep.subr.bf16.mxu0 0
    %244 = vmatpush1.bf16.msra.mxu0 0
    %245 = vmatprep.subr.bf16.mxu0 0
    %246 = vmatpush1.bf16.msra.mxu0 0
    %247 = vmatprep.subr.bf16.mxu0 0
    %248 = vmatpush1.bf16.msra.mxu0 0
    %249 = vmatprep.subr.bf16.mxu0 0
    %250 = vmatpush1.bf16.msra.mxu0 0
    %251 = vmatprep.mubr.bf16.mxu0 0
    %252 = vmatmul.mubr.bf16.gmra.mrb[0].mxu0 %v144
    %v253 = vpop.f32.mrb[0].mxu0
    %v254 = vadd.f32 %v169, %v253
    %v255 = vpop.f32.mrb[0].mxu0
    %v256 = vpop.f32.mrb[0].mxu0
    %v257 = vadd.f32 %v169, %v256
    %v258 = vpop.f32.mrb[0].mxu0
    %259 = vmatprep.mubr.bf16.mxu0 0
    %260 = vmatmul.mubr.bf16.gmra.mrb[0].mxu0 %v145
    %v261 = vpop.f32.mrb[0].mxu0
    %v262 = vadd.f32 %v169, %v261
    %v263 = vpop.f32.mrb[0].mxu0
    %v264 = vpop.f32.mrb[0].mxu0
    %v265 = vadd.f32 %v169, %v264
    %v266 = vpop.f32.mrb[0].mxu0
    %267 = vmatprep.mubr.bf16.mxu0 0
    %268 = vmatmul.mubr.bf16.gmra.mrb[0].mxu0 %v146
    %v269 = vpop.f32.mrb[0].mxu0
    %v270 = vadd.f32 %v169, %v269
    %v271 = vpop.f32.mrb[0].mxu0
    %v272 = vpop.f32.mrb[0].mxu0
    %v273 = vadd.f32 %v169, %v272
    %v274 = vpop.f32.mrb[0].mxu0
    %275 = vmatprep.mubr.bf16.mxu0 0
    %276 = vmatmul.mubr.bf16.gmra.mrb[0].mxu0 %v147
    %v277 = vpop.f32.mrb[0].mxu0
    %v278 = vadd.f32 %v169, %v277
    %v279 = vpop.f32.mrb[0].mxu0
    %v280 = vpop.f32.mrb[0].mxu0
    %v281 = vadd.f32 %v169, %v280
    %v282 = vpop.f32.mrb[0].mxu0
    %283 = vdwg.mxu0
    %284 = vst [vmem:[#allocation2] sm:$0xff] %v254
    %285 = vst [vmem:[#allocation2 + $0x8] sm:$0xff] %v257
    %286 = vst [vmem:[#allocation2 + $0x10] sm:$0xff] %v262
    %287 = vst [vmem:[#allocation2 + $0x18] sm:$0xff] %v265
    %288 = vst [vmem:[#allocation2 + $0x20] sm:$0xff] %v270
    %289 = vst [vmem:[#allocation2 + $0x28] sm:$0xff] %v273
    %290 = vst [vmem:[#allocation2 + $0x30] sm:$0xff] %v278
    %291 = vst [vmem:[#allocation2 + $0x38] sm:$0xff] %v281
    %v292 = vld [vmem:[#allocation6] sm:$0xf]
    %v293 = vld [vmem:[#allocation6 + $0x4] sm:$0xf]
    %v294 = vld [vmem:[#allocation6 + $0x8] sm:$0xf]
    %v295 = vld [vmem:[#allocation6 + $0xc] sm:$0xf]
    %v296 = vld [vmem:[%s7] sm:$0xff]
    %v297 = vld [vmem:[#allocation9] sm:$0xff]
    %v298 = vld [vmem:[#allocation2] sm:$0xff]
    %v299 = vpack.c.bf16 %v296, %v296
    %v304 = vunpack.c.l.b16 %v292
    %v305 = vunpack.c.l.b16 %v293
    %v306 = vunpack.c.l.b16 %v294
    %v307 = vunpack.c.l.b16 %v295
    %v308 = vpack.c.b16 %v305, %v304
    %v309 = vpack.c.b16 %v307, %v306
    %vm312 = vcmask 261120
    %v314 = vsel %vm312, %v299, 0
    %316 = vmatprep.subr.bf16.mxu0 0
    %317 = vmatpush1.bf16.msra.mxu0 %v308
    %318 = vmatprep.subr.bf16.mxu0 0
    %319 = vmatpush1.bf16.msra.mxu0 %v309
    %320 = vmatprep.subr.bf16.mxu0 0
    %321 = vmatpush1.bf16.msra.mxu0 0
    %322 = vmatprep.subr.bf16.mxu0 0
    %323 = vmatpush1.bf16.msra.mxu0 0
    %324 = vmatprep.subr.bf16.mxu0 0
    %325 = vmatpush1.bf16.msra.mxu0 0
    %326 = vmatprep.subr.bf16.mxu0 0
    %327 = vmatpush1.bf16.msra.mxu0 0
    %328 = vmatprep.subr.bf16.mxu0 0
    %329 = vmatpush1.bf16.msra.mxu0 0
    %330 = vmatprep.subr.bf16.mxu0 0
    %331 = vmatpush1.bf16.msra.mxu0 0
    %332 = vmatprep.subr.bf16.mxu0 0
    %333 = vmatpush1.bf16.msra.mxu0 0
    %334 = vmatprep.subr.bf16.mxu0 0
    %335 = vmatpush1.bf16.msra.mxu0 0
    %336 = vmatprep.subr.bf16.mxu0 0
    %337 = vmatpush1.bf16.msra.mxu0 0
    %338 = vmatprep.subr.bf16.mxu0 0
    %339 = vmatpush1.bf16.msra.mxu0 0
    %340 = vmatprep.subr.bf16.mxu0 0
    %341 = vmatpush1.bf16.msra.mxu0 0
    %342 = vmatprep.subr.bf16.mxu0 0
    %343 = vmatpush1.bf16.msra.mxu0 0
    %344 = vmatprep.subr.bf16.mxu0 0
    %345 = vmatpush1.bf16.msra.mxu0 0
    %346 = vmatprep.subr.bf16.mxu0 0
    %347 = vmatpush1.bf16.msra.mxu0 0
    %348 = vmatprep.mubr.bf16.mxu0 0
    %349 = vmatmul.mubr.bf16.gmra.mrb[0].mxu0 %v314
    %v350 = vpop.f32.mrb[0].mxu0
    %v351 = vadd.f32 0.0, %v350
    %v352 = vpop.f32.mrb[0].mxu0
    %v353 = vpop.f32.mrb[0].mxu0
    %v354 = vpop.f32.mrb[0].mxu0
    %355 = vdwg.mxu0
    %v356 = vadd.f32 %v298, %v351
    %v357 = vsub.f32 0.0, %v356
    %v358 = vmul.f32 %v357, 1.442695
    %v359 = vpow.pop %v358
    %v360 = vadd.f32 %v359, 1.0
    %v361 = vrcp.pop %v360
    %v362 = vmul.f32 1.0, %v361
    %v363 = vtanh.pop %v356
    %365 = vrot.lane.b32.xlu0 %v297, 32
    %v366 = vpop.permute.xlu0 %365
    %v368 = vmul.f32 %v362, %v366
    %370 = vrot.lane.b32.xlu0 %v363, 64
    %v371 = vpop.permute.xlu0 %370
    %v373 = vmul.f32 %v362, %v371
    %375 = vrot.lane.b32.xlu0 %v373, 32
    %v376 = vpop.permute.xlu0 %375
    %v378 = vadd.f32 %v368, %v376
    %v379 = vtanh.pop %v378
    %381 = vrot.lane.b32.xlu0 %v379, 64
    %v382 = vpop.permute.xlu0 %381
    %v384 = vmul.f32 %v362, %v382
    %s385 = scalar_lea.vmem [#allocation2], 8
    %v386 = vld [vmem:[%s385] sm:$0xff]
    %v387 = vpack.c.bf16 %v384, %v384
    %389 = vrot.lane.b32.xlu0 %v387, 32
    %v390 = vpop.permute.xlu0 %389
    %v392 = vsel %vm312, %v390, 0
    %394 = vmatprep.subr.bf16.mxu0 0
    %395 = vmatpush1.bf16.msra.mxu0 %v308
    %396 = vmatprep.subr.bf16.mxu0 0
    %397 = vmatpush1.bf16.msra.mxu0 %v309
    %398 = vmatprep.subr.bf16.mxu0 0
    %399 = vmatpush1.bf16.msra.mxu0 0
    %400 = vmatprep.subr.bf16.mxu0 0
    %401 = vmatpush1.bf16.msra.mxu0 0
    %402 = vmatprep.subr.bf16.mxu0 0
    %403 = vmatpush1.bf16.msra.mxu0 0
    %404 = vmatprep.subr.bf16.mxu0 0
    %405 = vmatpush1.bf16.msra.mxu0 0
    %406 = vmatprep.subr.bf16.mxu0 0
    %407 = vmatpush1.bf16.msra.mxu0 0
    %408 = vmatprep.subr.bf16.mxu0 0
    %409 = vmatpush1.bf16.msra.mxu0 0
    %410 = vmatprep.subr.bf16.mxu0 0
    %411 = vmatpush1.bf16.msra.mxu0 0
    %412 = vmatprep.subr.bf16.mxu0 0
    %413 = vmatpush1.bf16.msra.mxu0 0
    %414 = vmatprep.subr.bf16.mxu0 0
    %415 = vmatpush1.bf16.msra.mxu0 0
    %416 = vmatprep.subr.bf16.mxu0 0
    %417 = vmatpush1.bf16.msra.mxu0 0
    %418 = vmatprep.subr.bf16.mxu0 0
    %419 = vmatpush1.bf16.msra.mxu0 0
    %420 = vmatprep.subr.bf16.mxu0 0
    %421 = vmatpush1.bf16.msra.mxu0 0
    %422 = vmatprep.subr.bf16.mxu0 0
    %423 = vmatpush1.bf16.msra.mxu0 0
    %424 = vmatprep.subr.bf16.mxu0 0
    %425 = vmatpush1.bf16.msra.mxu0 0
    %426 = vmatprep.mubr.bf16.mxu0 0
    %427 = vmatmul.mubr.bf16.gmra.mrb[0].mxu0 %v392
    %v428 = vpop.f32.mrb[0].mxu0
    %v429 = vadd.f32 0.0, %v428
    %v430 = vpop.f32.mrb[0].mxu0
    %v431 = vpop.f32.mrb[0].mxu0
    %v432 = vpop.f32.mrb[0].mxu0
    %433 = vdwg.mxu0
    %v434 = vadd.f32 %v386, %v429
    %v435 = vsub.f32 0.0, %v434
    %v436 = vmul.f32 %v435, 1.442695
    %v437 = vpow.pop %v436
    %v438 = vadd.f32 %v437, 1.0
    %v439 = vrcp.pop %v438
    %v440 = vmul.f32 1.0, %v439
    %v441 = vtanh.pop %v434
    %v442 = vmul.f32 %v440, %v378
    %444 = vrot.lane.b32.xlu0 %v441, 64
    %v445 = vpop.permute.xlu0 %444
    %v447 = vmul.f32 %v440, %v445
    %449 = vrot.lane.b32.xlu0 %v447, 32
    %v450 = vpop.permute.xlu0 %449
    %v452 = vadd.f32 %v442, %v450
    %v453 = vtanh.pop %v452
    %455 = vrot.lane.b32.xlu0 %v453, 64
    %v456 = vpop.permute.xlu0 %455
    %v458 = vmul.f32 %v440, %v456
    %s459 = scalar_lea.vmem [#allocation2], 16
    %v460 = vld [vmem:[%s459] sm:$0xff]
    %v461 = vpack.c.bf16 %v458, %v458
    %463 = vrot.lane.b32.xlu0 %v461, 32
    %v464 = vpop.permute.xlu0 %463
    %v466 = vsel %vm312, %v464, 0
    %468 = vmatprep.subr.bf16.mxu0 0
    %469 = vmatpush1.bf16.msra.mxu0 %v308
    %470 = vmatprep.subr.bf16.mxu0 0
    %471 = vmatpush1.bf16.msra.mxu0 %v309
    %472 = vmatprep.subr.bf16.mxu0 0
    %473 = vmatpush1.bf16.msra.mxu0 0
    %474 = vmatprep.subr.bf16.mxu0 0
    %475 = vmatpush1.bf16.msra.mxu0 0
    %476 = vmatprep.subr.bf16.mxu0 0
    %477 = vmatpush1.bf16.msra.mxu0 0
    %478 = vmatprep.subr.bf16.mxu0 0
    %479 = vmatpush1.bf16.msra.mxu0 0
    %480 = vmatprep.subr.bf16.mxu0 0
    %481 = vmatpush1.bf16.msra.mxu0 0
    %482 = vmatprep.subr.bf16.mxu0 0
    %483 = vmatpush1.bf16.msra.mxu0 0
    %484 = vmatprep.subr.bf16.mxu0 0
    %485 = vmatpush1.bf16.msra.mxu0 0
    %486 = vmatprep.subr.bf16.mxu0 0
    %487 = vmatpush1.bf16.msra.mxu0 0
    %488 = vmatprep.subr.bf16.mxu0 0
    %489 = vmatpush1.bf16.msra.mxu0 0
    %490 = vmatprep.subr.bf16.mxu0 0
    %491 = vmatpush1.bf16.msra.mxu0 0
    %492 = vmatprep.subr.bf16.mxu0 0
    %493 = vmatpush1.bf16.msra.mxu0 0
    %494 = vmatprep.subr.bf16.mxu0 0
    %495 = vmatpush1.bf16.msra.mxu0 0
    %496 = vmatprep.subr.bf16.mxu0 0
    %497 = vmatpush1.bf16.msra.mxu0 0
    %498 = vmatprep.subr.bf16.mxu0 0
    %499 = vmatpush1.bf16.msra.mxu0 0
    %500 = vmatprep.mubr.bf16.mxu0 0
    %501 = vmatmul.mubr.bf16.gmra.mrb[0].mxu0 %v466
    %v502 = vpop.f32.mrb[0].mxu0
    %v503 = vadd.f32 0.0, %v502
    %v504 = vpop.f32.mrb[0].mxu0
    %v505 = vpop.f32.mrb[0].mxu0
    %v506 = vpop.f32.mrb[0].mxu0
    %507 = vdwg.mxu0
    %v508 = vadd.f32 %v460, %v503
    %v509 = vsub.f32 0.0, %v508
    %v510 = vmul.f32 %v509, 1.442695
    %v511 = vpow.pop %v510
    %v512 = vadd.f32 %v511, 1.0
    %v513 = vrcp.pop %v512
    %v514 = vmul.f32 1.0, %v513
    %v515 = vtanh.pop %v508
    %v516 = vmul.f32 %v514, %v452
    %518 = vrot.lane.b32.xlu0 %v515, 64
    %v519 = vpop.permute.xlu0 %518
    %v521 = vmul.f32 %v514, %v519
    %523 = vrot.lane.b32.xlu0 %v521, 32
    %v524 = vpop.permute.xlu0 %523
    %v526 = vadd.f32 %v516, %v524
    %v527 = vtanh.pop %v526
    %529 = vrot.lane.b32.xlu0 %v527, 64
    %v530 = vpop.permute.xlu0 %529
    %v532 = vmul.f32 %v514, %v530
    %s533 = scalar_lea.vmem [#allocation2], 24
    %v534 = vld [vmem:[%s533] sm:$0xff]
    %v535 = vpack.c.bf16 %v532, %v532
    %537 = vrot.lane.b32.xlu0 %v535, 32
    %v538 = vpop.permute.xlu0 %537
    %v540 = vsel %vm312, %v538, 0
    %542 = vmatprep.subr.bf16.mxu0 0
    %543 = vmatpush1.bf16.msra.mxu0 %v308
    %544 = vmatprep.subr.bf16.mxu0 0
    %545 = vmatpush1.bf16.msra.mxu0 %v309
    %546 = vmatprep.subr.bf16.mxu0 0
    %547 = vmatpush1.bf16.msra.mxu0 0
    %548 = vmatprep.subr.bf16.mxu0 0
    %549 = vmatpush1.bf16.msra.mxu0 0
    %550 = vmatprep.subr.bf16.mxu0 0
    %551 = vmatpush1.bf16.msra.mxu0 0
    %552 = vmatprep.subr.bf16.mxu0 0
    %553 = vmatpush1.bf16.msra.mxu0 0
    %554 = vmatprep.subr.bf16.mxu0 0
    %555 = vmatpush1.bf16.msra.mxu0 0
    %556 = vmatprep.subr.bf16.mxu0 0
    %557 = vmatpush1.bf16.msra.mxu0 0
    %558 = vmatprep.subr.bf16.mxu0 0
    %559 = vmatpush1.bf16.msra.mxu0 0
    %560 = vmatprep.subr.bf16.mxu0 0
    %561 = vmatpush1.bf16.msra.mxu0 0
    %562 = vmatprep.subr.bf16.mxu0 0
    %563 = vmatpush1.bf16.msra.mxu0 0
    %564 = vmatprep.subr.bf16.mxu0 0
    %565 = vmatpush1.bf16.msra.mxu0 0
    %566 = vmatprep.subr.bf16.mxu0 0
    %567 = vmatpush1.bf16.msra.mxu0 0
    %568 = vmatprep.subr.bf16.mxu0 0
    %569 = vmatpush1.bf16.msra.mxu0 0
    %570 = vmatprep.subr.bf16.mxu0 0
    %571 = vmatpush1.bf16.msra.mxu0 0
    %572 = vmatprep.subr.bf16.mxu0 0
    %573 = vmatpush1.bf16.msra.mxu0 0
    %574 = vmatprep.mubr.bf16.mxu0 0
    %575 = vmatmul.mubr.bf16.gmra.mrb[0].mxu0 %v540
    %v576 = vpop.f32.mrb[0].mxu0
    %v577 = vadd.f32 0.0, %v576
    %v578 = vpop.f32.mrb[0].mxu0
    %v579 = vpop.f32.mrb[0].mxu0
    %v580 = vpop.f32.mrb[0].mxu0
    %581 = vdwg.mxu0
    %v582 = vadd.f32 %v534, %v577
    %v583 = vsub.f32 0.0, %v582
    %v584 = vmul.f32 %v583, 1.442695
    %v585 = vpow.pop %v584
    %v586 = vadd.f32 %v585, 1.0
    %v587 = vrcp.pop %v586
    %v588 = vmul.f32 1.0, %v587
    %v589 = vtanh.pop %v582
    %v590 = vmul.f32 %v588, %v526
    %592 = vrot.lane.b32.xlu0 %v589, 64
    %v593 = vpop.permute.xlu0 %592
    %v595 = vmul.f32 %v588, %v593
    %597 = vrot.lane.b32.xlu0 %v595, 32
    %v598 = vpop.permute.xlu0 %597
    %v600 = vadd.f32 %v590, %v598
    %v601 = vtanh.pop %v600
    %603 = vrot.lane.b32.xlu0 %v601, 64
    %v604 = vpop.permute.xlu0 %603
    %v606 = vmul.f32 %v588, %v604
    %s607 = scalar_lea.vmem [#allocation2], 32
    %v608 = vld [vmem:[%s607] sm:$0xff]
    %v609 = vpack.c.bf16 %v606, %v606
    %611 = vrot.lane.b32.xlu0 %v609, 32
    %v612 = vpop.permute.xlu0 %611
    %v614 = vsel %vm312, %v612, 0
    %616 = vmatprep.subr.bf16.mxu0 0
    %617 = vmatpush1.bf16.msra.mxu0 %v308
    %618 = vmatprep.subr.bf16.mxu0 0
    %619 = vmatpush1.bf16.msra.mxu0 %v309
    %620 = vmatprep.subr.bf16.mxu0 0
    %621 = vmatpush1.bf16.msra.mxu0 0
    %622 = vmatprep.subr.bf16.mxu0 0
    %623 = vmatpush1.bf16.msra.mxu0 0
    %624 = vmatprep.subr.bf16.mxu0 0
    %625 = vmatpush1.bf16.msra.mxu0 0
    %626 = vmatprep.subr.bf16.mxu0 0
    %627 = vmatpush1.bf16.msra.mxu0 0
    %628 = vmatprep.subr.bf16.mxu0 0
    %629 = vmatpush1.bf16.msra.mxu0 0
    %630 = vmatprep.subr.bf16.mxu0 0
    %631 = vmatpush1.bf16.msra.mxu0 0
    %632 = vmatprep.subr.bf16.mxu0 0
    %633 = vmatpush1.bf16.msra.mxu0 0
    %634 = vmatprep.subr.bf16.mxu0 0
    %635 = vmatpush1.bf16.msra.mxu0 0
    %636 = vmatprep.subr.bf16.mxu0 0
    %637 = vmatpush1.bf16.msra.mxu0 0
    %638 = vmatprep.subr.bf16.mxu0 0
    %639 = vmatpush1.bf16.msra.mxu0 0
    %640 = vmatprep.subr.bf16.mxu0 0
    %641 = vmatpush1.bf16.msra.mxu0 0
    %642 = vmatprep.subr.bf16.mxu0 0
    %643 = vmatpush1.bf16.msra.mxu0 0
    %644 = vmatprep.subr.bf16.mxu0 0
    %645 = vmatpush1.bf16.msra.mxu0 0
    %646 = vmatprep.subr.bf16.mxu0 0
    %647 = vmatpush1.bf16.msra.mxu0 0
    %648 = vmatprep.mubr.bf16.mxu0 0
    %649 = vmatmul.mubr.bf16.gmra.mrb[0].mxu0 %v614
    %v650 = vpop.f32.mrb[0].mxu0
    %v651 = vadd.f32 0.0, %v650
    %v652 = vpop.f32.mrb[0].mxu0
    %v653 = vpop.f32.mrb[0].mxu0
    %v654 = vpop.f32.mrb[0].mxu0
    %655 = vdwg.mxu0
    %v656 = vadd.f32 %v608, %v651
    %v657 = vsub.f32 0.0, %v656
    %v658 = vmul.f32 %v657, 1.442695
    %v659 = vpow.pop %v658
    %v660 = vadd.f32 %v659, 1.0
    %v661 = vrcp.pop %v660
    %v662 = vmul.f32 1.0, %v661
    %v663 = vtanh.pop %v656
    %v664 = vmul.f32 %v662, %v600
    %666 = vrot.lane.b32.xlu0 %v663, 64
    %v667 = vpop.permute.xlu0 %666
    %v669 = vmul.f32 %v662, %v667
    %671 = vrot.lane.b32.xlu0 %v669, 32
    %v672 = vpop.permute.xlu0 %671
    %v674 = vadd.f32 %v664, %v672
    %v675 = vtanh.pop %v674
    %677 = vrot.lane.b32.xlu0 %v675, 64
    %v678 = vpop.permute.xlu0 %677
    %v680 = vmul.f32 %v662, %v678
    %s681 = scalar_lea.vmem [#allocation2], 40
    %v682 = vld [vmem:[%s681] sm:$0xff]
    %v683 = vpack.c.bf16 %v680, %v680
    %685 = vrot.lane.b32.xlu0 %v683, 32
    %v686 = vpop.permute.xlu0 %685
    %v688 = vsel %vm312, %v686, 0
    %690 = vmatprep.subr.bf16.mxu0 0
    %691 = vmatpush1.bf16.msra.mxu0 %v308
    %692 = vmatprep.subr.bf16.mxu0 0
    %693 = vmatpush1.bf16.msra.mxu0 %v309
    %694 = vmatprep.subr.bf16.mxu0 0
    %695 = vmatpush1.bf16.msra.mxu0 0
    %696 = vmatprep.subr.bf16.mxu0 0
    %697 = vmatpush1.bf16.msra.mxu0 0
    %698 = vmatprep.subr.bf16.mxu0 0
    %699 = vmatpush1.bf16.msra.mxu0 0
    %700 = vmatprep.subr.bf16.mxu0 0
    %701 = vmatpush1.bf16.msra.mxu0 0
    %702 = vmatprep.subr.bf16.mxu0 0
    %703 = vmatpush1.bf16.msra.mxu0 0
    %704 = vmatprep.subr.bf16.mxu0 0
    %705 = vmatpush1.bf16.msra.mxu0 0
    %706 = vmatprep.subr.bf16.mxu0 0
    %707 = vmatpush1.bf16.msra.mxu0 0
    %708 = vmatprep.subr.bf16.mxu0 0
    %709 = vmatpush1.bf16.msra.mxu0 0
    %710 = vmatprep.subr.bf16.mxu0 0
    %711 = vmatpush1.bf16.msra.mxu0 0
    %712 = vmatprep.subr.bf16.mxu0 0
    %713 = vmatpush1.bf16.msra.mxu0 0
    %714 = vmatprep.subr.bf16.mxu0 0
    %715 = vmatpush1.bf16.msra.mxu0 0
    %716 = vmatprep.subr.bf16.mxu0 0
    %717 = vmatpush1.bf16.msra.mxu0 0
    %718 = vmatprep.subr.bf16.mxu0 0
    %719 = vmatpush1.bf16.msra.mxu0 0
    %720 = vmatprep.subr.bf16.mxu0 0
    %721 = vmatpush1.bf16.msra.mxu0 0
    %722 = vmatprep.mubr.bf16.mxu0 0
    %723 = vmatmul.mubr.bf16.gmra.mrb[0].mxu0 %v688
    %v724 = vpop.f32.mrb[0].mxu0
    %v725 = vadd.f32 0.0, %v724
    %v726 = vpop.f32.mrb[0].mxu0
    %v727 = vpop.f32.mrb[0].mxu0
    %v728 = vpop.f32.mrb[0].mxu0
    %729 = vdwg.mxu0
    %v730 = vadd.f32 %v682, %v725
    %v731 = vsub.f32 0.0, %v730
    %v732 = vmul.f32 %v731, 1.442695
    %v733 = vpow.pop %v732
    %v734 = vadd.f32 %v733, 1.0
    %v735 = vrcp.pop %v734
    %v736 = vmul.f32 1.0, %v735
    %v737 = vtanh.pop %v730
    %v738 = vmul.f32 %v736, %v674
    %740 = vrot.lane.b32.xlu0 %v737, 64
    %v741 = vpop.permute.xlu0 %740
    %v743 = vmul.f32 %v736, %v741
    %745 = vrot.lane.b32.xlu0 %v743, 32
    %v746 = vpop.permute.xlu0 %745
    %v748 = vadd.f32 %v738, %v746
    %v749 = vtanh.pop %v748
    %751 = vrot.lane.b32.xlu0 %v749, 64
    %v752 = vpop.permute.xlu0 %751
    %v754 = vmul.f32 %v736, %v752
    %s755 = scalar_lea.vmem [#allocation2], 48
    %v756 = vld [vmem:[%s755] sm:$0xff]
    %v757 = vpack.c.bf16 %v754, %v754
    %759 = vrot.lane.b32.xlu0 %v757, 32
    %v760 = vpop.permute.xlu0 %759
    %v762 = vsel %vm312, %v760, 0
    %764 = vmatprep.subr.bf16.mxu0 0
    %765 = vmatpush1.bf16.msra.mxu0 %v308
    %766 = vmatprep.subr.bf16.mxu0 0
    %767 = vmatpush1.bf16.msra.mxu0 %v309
    %768 = vmatprep.subr.bf16.mxu0 0
    %769 = vmatpush1.bf16.msra.mxu0 0
    %770 = vmatprep.subr.bf16.mxu0 0
    %771 = vmatpush1.bf16.msra.mxu0 0
    %772 = vmatprep.subr.bf16.mxu0 0
    %773 = vmatpush1.bf16.msra.mxu0 0
    %774 = vmatprep.subr.bf16.mxu0 0
    %775 = vmatpush1.bf16.msra.mxu0 0
    %776 = vmatprep.subr.bf16.mxu0 0
    %777 = vmatpush1.bf16.msra.mxu0 0
    %778 = vmatprep.subr.bf16.mxu0 0
    %779 = vmatpush1.bf16.msra.mxu0 0
    %780 = vmatprep.subr.bf16.mxu0 0
    %781 = vmatpush1.bf16.msra.mxu0 0
    %782 = vmatprep.subr.bf16.mxu0 0
    %783 = vmatpush1.bf16.msra.mxu0 0
    %784 = vmatprep.subr.bf16.mxu0 0
    %785 = vmatpush1.bf16.msra.mxu0 0
    %786 = vmatprep.subr.bf16.mxu0 0
    %787 = vmatpush1.bf16.msra.mxu0 0
    %788 = vmatprep.subr.bf16.mxu0 0
    %789 = vmatpush1.bf16.msra.mxu0 0
    %790 = vmatprep.subr.bf16.mxu0 0
    %791 = vmatpush1.bf16.msra.mxu0 0
    %792 = vmatprep.subr.bf16.mxu0 0
    %793 = vmatpush1.bf16.msra.mxu0 0
    %794 = vmatprep.subr.bf16.mxu0 0
    %795 = vmatpush1.bf16.msra.mxu0 0
    %796 = vmatprep.mubr.bf16.mxu0 0
    %797 = vmatmul.mubr.bf16.gmra.mrb[0].mxu0 %v762
    %v798 = vpop.f32.mrb[0].mxu0
    %v799 = vadd.f32 0.0, %v798
    %v800 = vpop.f32.mrb[0].mxu0
    %v801 = vpop.f32.mrb[0].mxu0
    %v802 = vpop.f32.mrb[0].mxu0
    %803 = vdwg.mxu0
    %v804 = vadd.f32 %v756, %v799
    %v805 = vsub.f32 0.0, %v804
    %v806 = vmul.f32 %v805, 1.442695
    %v807 = vpow.pop %v806
    %v808 = vadd.f32 %v807, 1.0
    %v809 = vrcp.pop %v808
    %v810 = vmul.f32 1.0, %v809
    %v811 = vtanh.pop %v804
    %v812 = vmul.f32 %v810, %v748
    %814 = vrot.lane.b32.xlu0 %v811, 64
    %v815 = vpop.permute.xlu0 %814
    %v817 = vmul.f32 %v810, %v815
    %819 = vrot.lane.b32.xlu0 %v817, 32
    %v820 = vpop.permute.xlu0 %819
    %v822 = vadd.f32 %v812, %v820
    %v823 = vtanh.pop %v822
    %825 = vrot.lane.b32.xlu0 %v823, 64
    %v826 = vpop.permute.xlu0 %825
    %v828 = vmul.f32 %v810, %v826
    %s829 = scalar_lea.vmem [#allocation2], 56
    %v830 = vld [vmem:[%s829] sm:$0xff]
    %v831 = vpack.c.bf16 %v828, %v828
    %833 = vrot.lane.b32.xlu0 %v831, 32
    %v834 = vpop.permute.xlu0 %833
    %v836 = vsel %vm312, %v834, 0
    %838 = vmatprep.subr.bf16.mxu0 0
    %839 = vmatpush1.bf16.msra.mxu0 %v308
    %840 = vmatprep.subr.bf16.mxu0 0
    %841 = vmatpush1.bf16.msra.mxu0 %v309
    %842 = vmatprep.subr.bf16.mxu0 0
    %843 = vmatpush1.bf16.msra.mxu0 0
    %844 = vmatprep.subr.bf16.mxu0 0
    %845 = vmatpush1.bf16.msra.mxu0 0
    %846 = vmatprep.subr.bf16.mxu0 0
    %847 = vmatpush1.bf16.msra.mxu0 0
    %848 = vmatprep.subr.bf16.mxu0 0
    %849 = vmatpush1.bf16.msra.mxu0 0
    %850 = vmatprep.subr.bf16.mxu0 0
    %851 = vmatpush1.bf16.msra.mxu0 0
    %852 = vmatprep.subr.bf16.mxu0 0
    %853 = vmatpush1.bf16.msra.mxu0 0
    %854 = vmatprep.subr.bf16.mxu0 0
    %855 = vmatpush1.bf16.msra.mxu0 0
    %856 = vmatprep.subr.bf16.mxu0 0
    %857 = vmatpush1.bf16.msra.mxu0 0
    %858 = vmatprep.subr.bf16.mxu0 0
    %859 = vmatpush1.bf16.msra.mxu0 0
    %860 = vmatprep.subr.bf16.mxu0 0
    %861 = vmatpush1.bf16.msra.mxu0 0
    %862 = vmatprep.subr.bf16.mxu0 0
    %863 = vmatpush1.bf16.msra.mxu0 0
    %864 = vmatprep.subr.bf16.mxu0 0
    %865 = vmatpush1.bf16.msra.mxu0 0
    %866 = vmatprep.subr.bf16.mxu0 0
    %867 = vmatpush1.bf16.msra.mxu0 0
    %868 = vmatprep.subr.bf16.mxu0 0
    %869 = vmatpush1.bf16.msra.mxu0 0
    %870 = vmatprep.mubr.bf16.mxu0 0
    %871 = vmatmul.mubr.bf16.gmra.mrb[0].mxu0 %v836
    %v872 = vpop.f32.mrb[0].mxu0
    %v873 = vadd.f32 0.0, %v872
    %v874 = vpop.f32.mrb[0].mxu0
    %v875 = vpop.f32.mrb[0].mxu0
    %v876 = vpop.f32.mrb[0].mxu0
    %877 = vdwg.mxu0
    %v878 = vadd.f32 %v830, %v873
    %v879 = vsub.f32 0.0, %v878
    %v880 = vmul.f32 %v879, 1.442695
    %v881 = vpow.pop %v880
    %v882 = vadd.f32 %v881, 1.0
    %v883 = vrcp.pop %v882
    %v884 = vmul.f32 1.0, %v883
    %v885 = vtanh.pop %v878
    %v886 = vmul.f32 %v884, %v822
    %888 = vrot.lane.b32.xlu0 %v885, 64
    %v889 = vpop.permute.xlu0 %888
    %v891 = vmul.f32 %v884, %v889
    %893 = vrot.lane.b32.xlu0 %v891, 32
    %v894 = vpop.permute.xlu0 %893
    %v896 = vadd.f32 %v886, %v894
    %v897 = vtanh.pop %v896
    %899 = vrot.lane.b32.xlu0 %v897, 64
    %v900 = vpop.permute.xlu0 %899
    %v902 = vmul.f32 %v884, %v900
    %v903 = vpack.c.bf16 %v902, %v902
    %v904 = vld [vmem:[%s4] sm:$0xf]
    %v905 = vld [vmem:[%s4 + $0x4] sm:$0xf]
    %v906 = vld [vmem:[%s4 + $0x8] sm:$0xf]
    %v907 = vld [vmem:[%s4 + $0xc] sm:$0xf]
    %v908 = vld [vmem:[%s5] sm:$0x1]
    %v910 = vlaneseq
    %v911 = vshrl.u32 %v910, 7
    %v912 = vsub.s32 0, %v911
    %v913 = vrot.slane %v908, %v912
    %916 = vrot.lane.b32.xlu0 %v903, 32
    %v917 = vpop.permute.xlu0 %916
    %v922 = vunpack.c.l.b16 %v904
    %v923 = vunpack.c.l.b16 %v905
    %v924 = vunpack.c.l.b16 %v906
    %v925 = vunpack.c.l.b16 %v907
    %v926 = vpack.c.b16 %v923, %v922
    %v927 = vpack.c.b16 %v925, %v924
    %v931 = vsel %vm312, %v917, 0
    %933 = vmatprep.subr.bf16.mxu0 0
    %934 = vmatpush1.bf16.msra.mxu0 %v926
    %935 = vmatprep.subr.bf16.mxu0 0
    %936 = vmatpush1.bf16.msra.mxu0 %v927
    %937 = vmatprep.subr.bf16.mxu0 0
    %938 = vmatpush1.bf16.msra.mxu0 0
    %939 = vmatprep.subr.bf16.mxu0 0
    %940 = vmatpush1.bf16.msra.mxu0 0
    %941 = vmatprep.subr.bf16.mxu0 0
    %942 = vmatpush1.bf16.msra.mxu0 0
    %943 = vmatprep.subr.bf16.mxu0 0
    %944 = vmatpush1.bf16.msra.mxu0 0
    %945 = vmatprep.subr.bf16.mxu0 0
    %946 = vmatpush1.bf16.msra.mxu0 0
    %947 = vmatprep.subr.bf16.mxu0 0
    %948 = vmatpush1.bf16.msra.mxu0 0
    %949 = vmatprep.subr.bf16.mxu0 0
    %950 = vmatpush1.bf16.msra.mxu0 0
    %951 = vmatprep.subr.bf16.mxu0 0
    %952 = vmatpush1.bf16.msra.mxu0 0
    %953 = vmatprep.subr.bf16.mxu0 0
    %954 = vmatpush1.bf16.msra.mxu0 0
    %955 = vmatprep.subr.bf16.mxu0 0
    %956 = vmatpush1.bf16.msra.mxu0 0
    %957 = vmatprep.subr.bf16.mxu0 0
    %958 = vmatpush1.bf16.msra.mxu0 0
    %959 = vmatprep.subr.bf16.mxu0 0
    %960 = vmatpush1.bf16.msra.mxu0 0
    %961 = vmatprep.subr.bf16.mxu0 0
    %962 = vmatpush1.bf16.msra.mxu0 0
    %963 = vmatprep.subr.bf16.mxu0 0
    %964 = vmatpush1.bf16.msra.mxu0 0
    %965 = vmatprep.mubr.bf16.mxu0 0
    %966 = vmatmul.mubr.bf16.gmra.mrb[0].mxu0 %v931
    %v967 = vpop.f32.mrb[0].mxu0
    %v968 = vadd.f32 %v913, %v967
    %v969 = vpop.f32.mrb[0].mxu0
    %v970 = vpop.f32.mrb[0].mxu0
    %v971 = vpop.f32.mrb[0].mxu0
    %972 = vdwg.mxu0
    %v973 = vmul.f32 %v968, 1.442695
    %v974 = vpow.pop %v973
    %v975 = vld [vmem:[#allocation8] sm:$0xff]
    %977 = vrot.lane.b32.xlu0 %v975, 32
    %v978 = vpop.permute.xlu0 %977
    %v980 = vmul.f32 %v974, %v978
    %982 = vrot.lane.b32.xlu0 %v980, 96
    %v983 = vpop.permute.xlu0 %982
    %v985 = vadd.f32 %v968, %v983
    %986 = vst.msk [vmem:[#allocation11] sm:$0xff] %vm312, %v985
    %988 = vrot.lane.b32.xlu0 %v896, 96
    %v989 = vpop.permute.xlu0 %988
    %991 = vst.msk [vmem:[#allocation12] sm:$0xff] %vm312, %v989
    // Predicated region
    $region54: #{tpu_custom_call.1} parent=1 // pred_check
      _
    $region55: #{tpu_custom_call.1} parent=1 // pred_check_branch
      %993 = sbr.rel (0) target = $region57
    $region56: #{tpu_custom_call.1} parent=1 // pred_region
      %s995 = ssub.s32 128, 128
      %996 = vsyncadd [#allocation5], %s995
      %s998 = sshll.u32 [#allocation11], 4
      %s999 = int_to_ptr.vmem [resolvable:$true] %s998
      %1001 = dma.vmem_to_hbm [thread:$0]  %s999, 128, %s9, [#allocation5]
    $region57: #{tpu_custom_call.1} parent=1 // pred_fallthru
      _
    // Predicated region
    $region58: #{tpu_custom_call.1} parent=1 // pred_check
      _
    $region59: #{tpu_custom_call.1} parent=1 // pred_check_branch
      %1003 = sbr.rel (0) target = $region61
    $region60: #{tpu_custom_call.1} parent=1 // pred_region
      %s1005 = ssub.s32 128, 128
      %1006 = vsyncadd [#allocation13], %s1005
      %s1008 = sshll.u32 [#allocation12], 4
      %s1009 = int_to_ptr.vmem [resolvable:$true] %s1008
      %1011 = dma.vmem_to_hbm [thread:$0]  %s1009, 128, %s10, [#allocation13]
    $region61: #{tpu_custom_call.1} parent=1 // pred_fallthru
      _
    // Predicated region
    $region62: #{tpu_custom_call.1} parent=1 // pred_check
      _
    $region63: #{tpu_custom_call.1} parent=1 // pred_check_branch
      %1013 = sbr.rel (0) target = $region65
    $region64: #{tpu_custom_call.1} parent=1 // pred_region
      %1014 = dma.done [#allocation5], 128
    $region65: #{tpu_custom_call.1} parent=1 // pred_fallthru
      _
    // Predicated region
    $region66: #{tpu_custom_call.1} parent=1 // pred_check
      _
    $region67: #{tpu_custom_call.1} parent=1 // pred_check_branch
      %1016 = sbr.rel (0) target = $region69
    $region68: #{tpu_custom_call.1} parent=1 // pred_region
      %1017 = dma.done [#allocation13], 128
    $region69: #{tpu_custom_call.1} parent=1 // pred_fallthru
      _
    %1018 = vsyncpa [#allocation4], 1
    %1019 = vsyncpa [#allocation7], 1
    %1020 = vsyncpa [#allocation10], 1
    %1021 = vsyncpa [#allocation5], 1
    %1022 = vsyncpa [#allocation13], 1

</llo_original>
